<compile_context>
chip_gen: v5e
topology: v5e:2x2
jax: 0.10.0
libtpu: 0.0.40
codegen_flags: <defaults>
</compile_context>

<pallas_src>
import jax
import jax.numpy as jnp
from jax.experimental import pallas as pl
from jax.experimental.pallas import tpu as pltpu


def _round_up(x, m):
    return ((x + m - 1) // m) * m


def _vmem_budget_bytes():
    """Generation-aware VMEM budget: ~85% of physical VMEM (compiler headroom)."""
    try:
        cap = int(pltpu.get_tpu_info().vmem_capacity_bytes)
    except Exception:  # pragma: no cover - conservative fallback
        cap = 64 << 20
    return int(cap * 0.85)


def _pick_row_tile(R, cap):
    """>=2 row tiles per TensorCore when rows allow; MXU / packed-sublane aligned."""
    if R <= 8:
        return R
    target = pl.cdiv(R, 4)               # 2 TCs (v7x) x 2 tiles each
    if target >= 256:
        tm = _round_up(target, 256)      # MXU systolic tile (v6e/v7x)
    elif target >= 16:
        tm = _round_up(target, 16)       # bf16 packed sublanes
    else:
        tm = _round_up(target, 8)
    return max(8, min(cap, tm, _round_up(R, 8)))


def _pick_div_tile(total, cap, quantum=128):
    """Largest multiple of `quantum` <= cap that divides `total` (else `total`)."""
    if total <= cap or total % quantum != 0:
        return total
    best = quantum
    t = quantum
    while t <= cap:
        if total % t == 0:
            best = t
        t += quantum
    return best


# ----------------------------- Pallas kernels ------------------------------ #
def _make_resident_kernel(n_present):
    """Whole-weight-resident path: acc = sum_p feat_p @ W_p ; out = acc + b."""

    def kernel(*refs):
        feat_refs = refs[:n_present]           # each (TM, H)
        w_ref = refs[n_present]                # (P, H, Hp)  VMEM-resident
        b_ref = refs[n_present + 1]            # (1, Hp)     f32
        o_ref = refs[n_present + 2]            # (TM, Hp)

        mxu_dtype = w_ref.dtype
        acc = None
        for p in range(n_present):             # static unroll over present modalities
            x = feat_refs[p][...]
            if x.dtype != mxu_dtype:
                x = x.astype(mxu_dtype)        # bf16 operands, f32 accumulation
            d = jnp.dot(x, w_ref[p], preferred_element_type=jnp.float32)
            acc = d if acc is None else acc + d
        o_ref[...] = (acc + b_ref[...].astype(jnp.float32)).astype(o_ref.dtype)

    return kernel


def _make_kn_tiled_kernel(n_present):
    """K/N-tiled path with f32 VMEM accumulator (init at k==0, store at k==last)."""

    def kernel(*refs):
        feat_refs = refs[:n_present]           # each (TM, TK)
        w_ref = refs[n_present]                # (P, TK, TN)
        b_ref = refs[n_present + 1]            # (1, TN)  f32
        o_ref = refs[n_present + 2]            # (TM, TN)
        acc_ref = refs[n_present + 3]          # (TM, TN) f32 scratch

        k = pl.program_id(2)

        @pl.when(k == 0)
        def _():
            acc_ref[...] = jnp.zeros_like(acc_ref)

        mxu_dtype = w_ref.dtype
        part = None
        for p in range(n_present):
            x = feat_refs[p][...]
            if x.dtype != mxu_dtype:
                x = x.astype(mxu_dtype)
            d = jnp.dot(x, w_ref[p], preferred_element_type=jnp.float32)
            part = d if part is None else part + d
        acc_ref[...] += part

        @pl.when(k == pl.num_programs(2) - 1)
        def _():
            o_ref[...] = (acc_ref[...] + b_ref[...].astype(jnp.float32)).astype(
                o_ref.dtype)

    return kernel


# ------------------------------ dispatcher --------------------------------- #
def _fused_linear(feats2d, weight_t3, bias_row, out_dtype, *, row_tile=512,
                  tile_n=512, tile_k=512, force_kn_tiling=False):
    """feats2d: P arrays (R, H); weight_t3: (M, H, Hp); bias_row: (1, Hp) f32."""
    P = len(feats2d)
    R, H = feats2d[0].shape
    Hp = weight_t3.shape[-1]

    f_item = jnp.dtype(feats2d[0].dtype).itemsize
    w_item = jnp.dtype(weight_t3.dtype).itemsize
    o_item = jnp.dtype(out_dtype).itemsize

    budget = _vmem_budget_bytes()
    tm = _pick_row_tile(R, row_tile)

    # Conservative (double-buffered-weight) cost of the resident path; used only
    # to decide which path fits.
    resident_bytes = (2 * P * H * Hp * w_item
                      + 2 * P * tm * H * f_item
                      + 2 * tm * Hp * o_item
                      + 2 * Hp * 4)
    use_kn = force_kn_tiling or resident_bytes > budget

    if not use_kn:
        # -------- resident-weight path (weight/bias single-buffered) -------- #
        grid = (pl.cdiv(R, tm),)

        def build(single_buffer_invariants):
            inv_kw = ({"pipeline_mode": pl.Buffered(1)}
                      if single_buffer_invariants else {})
            in_specs = (
                [pl.BlockSpec((tm, H), lambda i: (i, 0)) for _ in range(P)]
                + [pl.BlockSpec((P, H, Hp), lambda i: (0, 0, 0), **inv_kw),
                   pl.BlockSpec((1, Hp), lambda i: (0, 0), **inv_kw)]
            )
            out_spec = pl.BlockSpec((tm, Hp), lambda i: (i, 0))
            w_bufs = 1 if single_buffer_invariants else 2
            vmem_needed = (2 * P * tm * H * f_item
                           + 2 * tm * Hp * o_item
                           + w_bufs * P * H * Hp * w_item
                           + w_bufs * Hp * 4)
            vmem_limit = int(min(budget, max(int(1.25 * vmem_needed), 16 << 20)))
            return pl.pallas_call(
                _make_resident_kernel(P),
                out_shape=jax.ShapeDtypeStruct((R, Hp), out_dtype),
                grid_spec=pltpu.PrefetchScalarGridSpec(
                    num_scalar_prefetch=0, grid=grid,
                    in_specs=in_specs, out_specs=out_spec),
                compiler_params=pltpu.CompilerParams(
                    dimension_semantics=("parallel",),
                    vmem_limit_bytes=vmem_limit),
            )

        try:
            return build(True)(*feats2d, weight_t3, bias_row)
        except Exception:
            # Fallback if pipeline_mode=pl.Buffered(1) is unsupported here.
            return build(False)(*feats2d, weight_t3, bias_row)

    # ------------------------- K/N-tiled path ------------------------------- #
    tk = _pick_div_tile(H, max(128, _round_up(tile_k, 128)))   # divides H exactly
    tn = _pick_div_tile(Hp, max(128, _round_up(tile_n, 128)))  # divides Hp exactly
    grid = (pl.cdiv(R, tm), Hp // tn, H // tk)

    in_specs = (
        [pl.BlockSpec((tm, tk), lambda i, j, k: (i, k)) for _ in range(P)]
        + [pl.BlockSpec((P, tk, tn), lambda i, j, k: (0, k, j)),
           pl.BlockSpec((1, tn), lambda i, j, k: (0, j))]
    )
    out_spec = pl.BlockSpec((tm, tn), lambda i, j, k: (i, j))

    vmem_needed = (2 * P * tm * tk * f_item
                   + 2 * P * tk * tn * w_item
                   + 2 * tm * tn * o_item
                   + 2 * tn * 4
                   + tm * tn * 4)                      # accumulator scratch
    vmem_limit = int(min(budget, max(int(1.25 * vmem_needed), 16 << 20)))

    return pl.pallas_call(
        _make_kn_tiled_kernel(P),
        out_shape=jax.ShapeDtypeStruct((R, Hp), out_dtype),
        grid_spec=pltpu.PrefetchScalarGridSpec(
            num_scalar_prefetch=0, grid=grid,
            in_specs=in_specs, out_specs=out_spec,
            scratch_shapes=[pltpu.VMEM((tm, tn), jnp.float32)]),
        compiler_params=pltpu.CompilerParams(
            dimension_semantics=("parallel", "parallel", "arbitrary"),
            vmem_limit_bytes=vmem_limit),
    )(*feats2d, weight_t3, bias_row)


# --------------------------- Module equivalent ----------------------------- #
class ModalityCompletionPallas:
    def __init__(self, input_modalities, hidden_dim, key,
                 compute_dtype=jnp.bfloat16, row_tile=512,
                 tile_n=512, tile_k=512, force_kn_tiling=False):
        self.input_modalities = tuple(input_modalities)
        self.hidden_dim = hidden_dim
        self.row_tile = row_tile
        self.tile_n = tile_n
        self.tile_k = tile_k
        self.force_kn_tiling = force_kn_tiling

        M = len(self.input_modalities)
        in_features = M * hidden_dim

        # Deterministic init mimicking nn.Linear default (uniform +/- 1/sqrt(fan_in)).
        kw, kb = jax.random.split(key)
        bound = 1.0 / (in_features ** 0.5)
        self.weight = jax.random.uniform(
            kw, (hidden_dim, in_features), jnp.float32, -bound, bound)
        self.bias = jax.random.uniform(kb, (hidden_dim,), jnp.float32, -bound, bound)

        # Pre-transposed weight, stored ONCE: slab m multiplies concat slot m.
        #   weight_t3[m, i, j] == weight[j, m*H + i]
        # Output columns zero-padded to a lane-dense multiple of 128.
        Hp = max(_round_up(hidden_dim, 128), 128)
        self.padded_dim = Hp
        w_t3 = self.weight.T.reshape(M, hidden_dim, hidden_dim)
        if Hp != hidden_dim:
            w_t3 = jnp.pad(w_t3, ((0, 0), (0, 0), (0, Hp - hidden_dim)))
            bias_p = jnp.pad(self.bias, (0, Hp - hidden_dim))
        else:
            bias_p = self.bias
        self.weight_t3 = jnp.asarray(w_t3, compute_dtype)      # (M, H, Hp)
        self.bias_row = bias_p.reshape(1, Hp)                   # stays f32

    def __call__(self, modal_feats: dict):
        # Present modalities occupy the leading concat slots (in input order);
        # missing modalities would fill the TRAILING slots with zeros, so their
        # contribution is exactly zero and they are skipped (static specialization).
        present = []
        for m in self.input_modalities:
            feat = modal_feats.get(m, None)
            if feat is not None:
                present.append(feat)
        if not present:
            raise ValueError("No available modalities for completion.")

        H = self.hidden_dim
        lead_shape = present[0].shape[:-1]
        feats2d = [f.reshape(-1, H) for f in present]

        out2d = _fused_linear(
            feats2d, self.weight_t3, self.bias_row,
            out_dtype=present[0].dtype, row_tile=self.row_tile,
            tile_n=self.tile_n, tile_k=self.tile_k,
            force_kn_tiling=self.force_kn_tiling)

        if self.padded_dim != H:
            out2d = out2d[:, :H]
        return out2d.reshape(*lead_shape, H)


# ------------------------------ reference ---------------------------------- #
def _reference(module, modal_feats):
    """Pure-JAX f32 reference reproducing the PyTorch concat-with-zeros path."""
    existing = []
    for m in module.input_modalities:
        f = modal_feats.get(m, None)
        if f is not None:
            existing.append(f)
    template = existing[0]
    for m in module.input_modalities:
        if modal_feats.get(m, None) is None:
            existing.append(jnp.zeros_like(template))
    fused = jnp.concatenate(existing, axis=-1)
    return fused @ module.weight.T + module.bias


if __name__ == "__main__":
    key = jax.random.PRNGKey(0)
    k_mod, k_img, k_txt, k_aud = jax.random.split(key, 4)

    modalities = ("image", "text", "audio")
    hidden_dim = 32
    batch, seq = 2, 8

    # f32 weights for a tight check vs the f32 reference; "audio" missing
    # exercises the skipped-zero-slot path and the lane-padded (H<128) output.
    module = ModalityCompletionPallas(modalities, hidden_dim, k_mod,
                                      compute_dtype=jnp.float32)
    modal_feats = {
        "image": jax.random.normal(k_img, (batch, seq, hidden_dim), jnp.float32),
        "text": jax.random.normal(k_txt, (batch, seq, hidden_dim), jnp.float32),
        "audio": None,
    }
    out = jax.block_until_ready(module(modal_feats))
    ref = _reference(module, modal_feats)
    assert out.shape == (batch, seq, hidden_dim), out.shape
    assert jnp.allclose(out, ref, atol=1e-5, rtol=1e-5), "f32 mismatch vs reference"

    # All modalities present, multi-row-tile grid (grid > 1 row tiles).
    full_feats = dict(modal_feats)
    full_feats["audio"] = jax.random.normal(
        k_aud, (batch, seq, hidden_dim), jnp.float32)
    out_f = jax.block_until_ready(module(full_feats))
    ref_f = _reference(module, full_feats)
    assert jnp.allclose(out_f, ref_f, atol=1e-5, rtol=1e-5), "full-modality mismatch"

    # K/N-tiled path (f32 accumulator + pl.when init/finalize), H=256, forced tiling.
    module_kn = ModalityCompletionPallas(
        modalities, 256, k_mod, compute_dtype=jnp.float32,
        force_kn_tiling=True, tile_n=128, tile_k=128)
    feats_kn = {
        "image": jax.random.normal(k_img, (batch, seq, 256), jnp.float32),
        "text": None,
        "audio": jax.random.normal(k_aud, (batch, seq, 256), jnp.float32),
    }
    out_kn = jax.block_until_ready(module_kn(feats_kn))
    ref_kn = _reference(module_kn, feats_kn)
    assert jnp.allclose(out_kn, ref_kn, atol=1e-3, rtol=1e-3), "K/N-tiled mismatch"

    # Default compute_dtype (bf16 weight slabs, f32 accumulation) -- looser
    # tolerance vs the f32 reference: the stored weight is quantized once at init.
    module_bf16 = ModalityCompletionPallas(modalities, hidden_dim, k_mod)
    out_b = jax.block_until_ready(module_bf16(modal_feats))
    assert jnp.allclose(out_b, ref, atol=7e-2, rtol=7e-2), "bf16 mismatch"

    print("KERNEL_OK")
</pallas_src>

<mosaic_0001>
module attributes {stable_mosaic.version = 11 : i64} {
  func.func @kernel(%arg0: i32, %arg1: memref<8x32xf32, #tpu.memory_space<vmem>>, %arg2: memref<8x32xf32, #tpu.memory_space<vmem>>, %arg3: memref<2x32x128xf32, #tpu.memory_space<vmem>>, %arg4: memref<1x128xf32, #tpu.memory_space<vmem>>, %arg5: memref<8x128xf32, #tpu.memory_space<vmem>>) attributes {dimension_semantics = [#tpu.dimension_semantics<parallel>], iteration_bounds = array<i64: 2>, scalar_prefetch = 0 : i64, scratch_operands = 0 : i64, tpu.core_type = #tpu.core_type<tc>, window_params = [{transform_indices = @transform_0, window_bounds = array<i64: 8, 32>}, {transform_indices = @transform_1, window_bounds = array<i64: 8, 32>}, {pipeline_mode = #tpu.pipeline_mode<synchronous>, transform_indices = @transform_2, window_bounds = array<i64: 2, 32, 128>}, {pipeline_mode = #tpu.pipeline_mode<synchronous>, transform_indices = @transform_3, window_bounds = array<i64: 1, 128>}, {transform_indices = @transform_4, window_bounds = array<i64: 8, 128>}]} {
    %c0 = arith.constant 0 : index
    %c0_0 = arith.constant 0 : index
    %0 = vector.load %arg1[%c0, %c0_0] : memref<8x32xf32, #tpu.memory_space<vmem>>, vector<8x32xf32>
    %c0_1 = arith.constant 0 : index
    %c0_2 = arith.constant 0 : index
    %c0_3 = arith.constant 0 : index
    %1 = vector.load %arg3[%c0_1, %c0_2, %c0_3] : memref<2x32x128xf32, #tpu.memory_space<vmem>>, vector<1x32x128xf32>
    %2 = vector.shape_cast %1 : vector<1x32x128xf32> to vector<32x128xf32>
    %cst = arith.constant dense<0.000000e+00> : vector<8x128xf32>
    %3 = tpu.matmul %0, %2, %cst {dimension_numbers = #tpu.dot_dimension_numbers<[1], [0], [0], [1], [0, 0, 1, 1], [], []>} : vector<8x32xf32>, vector<32x128xf32>, vector<8x128xf32> -> vector<8x128xf32>
    %c0_4 = arith.constant 0 : index
    %c0_5 = arith.constant 0 : index
    %4 = vector.load %arg2[%c0_4, %c0_5] : memref<8x32xf32, #tpu.memory_space<vmem>>, vector<8x32xf32>
    %c1 = arith.constant 1 : index
    %c0_6 = arith.constant 0 : index
    %c0_7 = arith.constant 0 : index
    %5 = vector.load %arg3[%c1, %c0_6, %c0_7] : memref<2x32x128xf32, #tpu.memory_space<vmem>>, vector<1x32x128xf32>
    %6 = vector.shape_cast %5 : vector<1x32x128xf32> to vector<32x128xf32>
    %cst_8 = arith.constant dense<0.000000e+00> : vector<8x128xf32>
    %7 = tpu.matmul %4, %6, %cst_8 {dimension_numbers = #tpu.dot_dimension_numbers<[1], [0], [0], [1], [0, 0, 1, 1], [], []>} : vector<8x32xf32>, vector<32x128xf32>, vector<8x128xf32> -> vector<8x128xf32>
    %8 = arith.addf %3, %7 : vector<8x128xf32>
    %c0_9 = arith.constant 0 : index
    %c0_10 = arith.constant 0 : index
    %9 = vector.load %arg4[%c0_9, %c0_10] : memref<1x128xf32, #tpu.memory_space<vmem>>, vector<1x128xf32>
    %10 = vector.broadcast %9 : vector<1x128xf32> to vector<8x128xf32>
    %11 = arith.addf %8, %10 : vector<8x128xf32>
    %c0_11 = arith.constant 0 : index
    %c0_12 = arith.constant 0 : index
    %12 = vector.load %arg5[%c0_11, %c0_12] : memref<8x128xf32, #tpu.memory_space<vmem>>, vector<8x128xf32>
    tpu.vector_store %arg5[%c0_11, %c0_12], %11 {strides = array<i32>} : memref<8x128xf32, #tpu.memory_space<vmem>>, vector<8x128xf32>,
    return
  }
  func.func @transform_0(%arg0: i32) -> (i32, i32) {
    %c0_i32 = arith.constant 0 : i32
    %c0_i32_0 = arith.constant 0 : i32
    return %arg0, %c0_i32 : i32, i32
  }
  func.func @transform_1(%arg0: i32) -> (i32, i32) {
    %c0_i32 = arith.constant 0 : i32
    %c0_i32_0 = arith.constant 0 : i32
    return %arg0, %c0_i32 : i32, i32
  }
  func.func @transform_2(%arg0: i32) -> (i32, i32, i32) {
    %c0_i32 = arith.constant 0 : i32
    %c0_i32_0 = arith.constant 0 : i32
    %c0_i32_1 = arith.constant 0 : i32
    %c0_i32_2 = arith.constant 0 : i32
    return %c0_i32, %c0_i32_0, %c0_i32_1 : i32, i32, i32
  }
  func.func @transform_3(%arg0: i32) -> (i32, i32) {
    %c0_i32 = arith.constant 0 : i32
    %c0_i32_0 = arith.constant 0 : i32
    %c0_i32_1 = arith.constant 0 : i32
    return %c0_i32, %c0_i32_0 : i32, i32
  }
  func.func @transform_4(%arg0: i32) -> (i32, i32) {
    %c0_i32 = arith.constant 0 : i32
    %c0_i32_0 = arith.constant 0 : i32
    return %arg0, %c0_i32 : i32, i32
  }
}

module attributes {stable_mosaic.version = 11 : i64} {
  func.func @kernel(%arg0: i32, %arg1: memref<8x32xf32, #tpu.memory_space<vmem>>, %arg2: memref<8x32xf32, #tpu.memory_space<vmem>>, %arg3: memref<2x32x128xf32, #tpu.memory_space<vmem>>, %arg4: memref<1x128xf32, #tpu.memory_space<vmem>>, %arg5: memref<8x128xf32, #tpu.memory_space<vmem>>) attributes {dimension_semantics = [#tpu.dimension_semantics<parallel>], iteration_bounds = array<i64: 2>, scalar_prefetch = 0 : i64, scratch_operands = 0 : i64, tpu.core_type = #tpu.core_type<tc>, window_params = [{transform_indices = @transform_0, window_bounds = array<i64: 8, 32>}, {transform_indices = @transform_1, window_bounds = array<i64: 8, 32>}, {transform_indices = @transform_2, window_bounds = array<i64: 2, 32, 128>}, {pipeline_mode = #tpu.pipeline_mode<synchronous>, transform_indices = @transform_3, window_bounds = array<i64: 1, 128>}, {transform_indices = @transform_4, window_bounds = array<i64: 8, 128>}]} {
    %c0 = arith.constant 0 : index
    %c0_0 = arith.constant 0 : index
    %0 = vector.load %arg1[%c0, %c0_0] : memref<8x32xf32, #tpu.memory_space<vmem>>, vector<8x32xf32>
    %c0_1 = arith.constant 0 : index
    %c0_2 = arith.constant 0 : index
    %c0_3 = arith.constant 0 : index
    %1 = vector.load %arg3[%c0_1, %c0_2, %c0_3] : memref<2x32x128xf32, #tpu.memory_space<vmem>>, vector<1x32x128xf32>
    %2 = vector.shape_cast %1 : vector<1x32x128xf32> to vector<32x128xf32>
    %cst = arith.constant dense<0.000000e+00> : vector<8x128xf32>
    %3 = tpu.matmul %0, %2, %cst {dimension_numbers = #tpu.dot_dimension_numbers<[1], [0], [0], [1], [0, 0, 1, 1], [], []>} : vector<8x32xf32>, vector<32x128xf32>, vector<8x128xf32> -> vector<8x128xf32>
    %c0_4 = arith.constant 0 : index
    %c0_5 = arith.constant 0 : index
    %4 = vector.load %arg2[%c0_4, %c0_5] : memref<8x32xf32, #tpu.memory_space<vmem>>, vector<8x32xf32>
    %c1 = arith.constant 1 : index
    %c0_6 = arith.constant 0 : index
    %c0_7 = arith.constant 0 : index
    %5 = vector.load %arg3[%c1, %c0_6, %c0_7] : memref<2x32x128xf32, #tpu.memory_space<vmem>>, vector<1x32x128xf32>
    %6 = vector.shape_cast %5 : vector<1x32x128xf32> to vector<32x128xf32>
    %cst_8 = arith.constant dense<0.000000e+00> : vector<8x128xf32>
    %7 = tpu.matmul %4, %6, %cst_8 {dimension_numbers = #tpu.dot_dimension_numbers<[1], [0], [0], [1], [0, 0, 1, 1], [], []>} : vector<8x32xf32>, vector<32x128xf32>, vector<8x128xf32> -> vector<8x128xf32>
    %8 = arith.addf %3, %7 : vector<8x128xf32>
    %c0_9 = arith.constant 0 : index
    %c0_10 = arith.constant 0 : index
    %9 = vector.load %arg4[%c0_9, %c0_10] : memref<1x128xf32, #tpu.memory_space<vmem>>, vector<1x128xf32>
    %10 = vector.broadcast %9 : vector<1x128xf32> to vector<8x128xf32>
    %11 = arith.addf %8, %10 : vector<8x128xf32>
    %c0_11 = arith.constant 0 : index
    %c0_12 = arith.constant 0 : index
    %12 = vector.load %arg5[%c0_11, %c0_12] : memref<8x128xf32, #tpu.memory_space<vmem>>, vector<8x128xf32>
    tpu.vector_store %arg5[%c0_11, %c0_12], %11 {strides = array<i32>} : memref<8x128xf32, #tpu.memory_space<vmem>>, vector<8x128xf32>,
    return
  }
  func.func @transform_0(%arg0: i32) -> (i32, i32) {
    %c0_i32 = arith.constant 0 : i32
    %c0_i32_0 = arith.constant 0 : i32
    return %arg0, %c0_i32 : i32, i32
  }
  func.func @transform_1(%arg0: i32) -> (i32, i32) {
    %c0_i32 = arith.constant 0 : i32
    %c0_i32_0 = arith.constant 0 : i32
    return %arg0, %c0_i32 : i32, i32
  }
  func.func @transform_2(%arg0: i32) -> (i32, i32, i32) {
    %c0_i32 = arith.constant 0 : i32
    %c0_i32_0 = arith.constant 0 : i32
    %c0_i32_1 = arith.constant 0 : i32
    %c0_i32_2 = arith.constant 0 : i32
    return %c0_i32, %c0_i32_0, %c0_i32_1 : i32, i32, i32
  }
  func.func @transform_3(%arg0: i32) -> (i32, i32) {
    %c0_i32 = arith.constant 0 : i32
    %c0_i32_0 = arith.constant 0 : i32
    %c0_i32_1 = arith.constant 0 : i32
    return %c0_i32, %c0_i32_0 : i32, i32
  }
  func.func @transform_4(%arg0: i32) -> (i32, i32) {
    %c0_i32 = arith.constant 0 : i32
    %c0_i32_0 = arith.constant 0 : i32
    return %arg0, %c0_i32 : i32, i32
  }
}

</mosaic_0001>

<llo_original>
// kernel: tpu_custom_call.1
$region0: #{tpu_custom_call.1}
  #allocation0 [shape = 'u32[]', space=smem, size = 0x4, offset = 0x4, fixed_abs, tag = 'smem constant byte address 0x4 - core index']
  #allocation1 [shape = 'u32[72,128]{1,0:T(1,128)}', space=vmem, size = 0x9000, scoped, tag = 'internal scratch']
  %s0 = inlined_call_operand.hbm [shape: f32[16,32], index: 0, kind: input, shape index: {}]
  %s1 = inlined_call_operand.hbm [shape: f32[16,32], index: 1, kind: input, shape index: {}]
  %s2 = inlined_call_operand.hbm [shape: f32[3,32,128], index: 2, kind: input, shape index: {}]
  %s3 = inlined_call_operand.vmem [shape: f32[1,128], index: 3, kind: input, shape index: {}]
  %s4 = inlined_call_operand.hbm [shape: f32[16,128], index: 4, kind: output, shape index: {}]
  %s5 = sld [smem:[#allocation0]]
  $region61: #{tpu_custom_call.1} parent=0
    _
  %s7 = ssub.s32 1, %s5
  %s8 = scalar_select 0, %s7, %s5
  $region1: #{tpu_custom_call.1} parent=0
    #allocation2 [shape = 'u8[8192]{0}', space=vmem, size = 0x2000, scoped, tag = 'input window, operand 0']
    #allocation3 [shape = 's32[2]{0}', space=sflag, size = 0x8, scoped, tag = 'scoped memory for tpu_custom_call.1']
    #allocation4 [shape = 's32[2]{0}', space=sflag, size = 0x8, scoped, tag = 'scoped memory for tpu_custom_call.1']
    #allocation5 [shape = 'u8[8192]{0}', space=vmem, size = 0x2000, scoped, tag = 'input window, operand 1']
    #allocation6 [shape = 's32[2]{0}', space=sflag, size = 0x8, scoped, tag = 'scoped memory for tpu_custom_call.1']
    #allocation7 [shape = 'u8[32768]{0}', space=vmem, size = 0x8000, scoped, tag = 'input window, operand 2, single buffered']
    #allocation8 [shape = 'u8[8192]{0}', space=vmem, size = 0x2000, scoped, tag = 'output window, operand 0']
    %9 = vsyncpa [#allocation3], 0
    %s10 = scalar_lea.sflag [#allocation3], 1
    %11 = vsyncpa %s10, 0
    %12 = vsyncpa [#allocation6], 0
    %s13 = scalar_lea.sflag [#allocation6], 1
    %14 = vsyncpa %s13, 0
    %15 = vsyncpa [#allocation4], 0
    %s16 = scalar_lea.sflag [#allocation4], 1
    %17 = vsyncpa %s16, 0
    loop: start=0, step=1, limit=4
    $region2: #{tpu_custom_call.1} parent=1 // loop_pre_header
      _
    $region3: #{tpu_custom_call.1} parent=1 // loop_header
      %s19 = sphi 0, %s23
      %p20 = scmp.ge.s32.totalorder %s19, 4
      %s29 = sphi 0, %s31
      %s32 = sphi 0, %s29
      %s33 = sphi 0, %s32
      %s49 = sphi 0, %s33
      %s55 = sphi 0, %s57
      %s58 = sphi 0, %s55
      %s59 = sphi 0, %s58
      %s75 = sphi 0, %s59
      %s79 = sphi 0, %s79
      %s81 = sphi 0, %s79
      %s82 = sphi 0, %s81
      %s96 = sphi 0, %s82
      %s100 = sphi 0, %s100
      %s102 = sphi 0, %s100
      %s103 = sphi 0, %s102
      %s117 = sphi 0, %s103
      %s123 = sphi 0, %s125
      %s126 = sphi 0, %s123
      %s127 = sphi 0, %s126
      %s143 = sphi 0, %s127
    $region4: #{tpu_custom_call.1} parent=1 // loop_header_branch
      %22 = sbr.rel (%p20) target = $region8
    $region5: #{tpu_custom_call.1} parent=1 // loop_body
      %s24 = ssub.s32 %s19, 1
      %s25 = ssub.s32 %s19, 2
      %s26 = sadd.s32 %s19, 1
      %s27 = ssub.s32 %s19, %s26
      %p28 = scmp.eq.s32.totalorder %s27, 0
      %s30 = sadd.s32 %s29, 1
      %s31 = scalar_select %p28, %s29, %s30
      %p34 = pneg %p28
      %p35 = scmp.eq.s32.totalorder %s19, 1
      %p36 = por %p34, %p35
      %p37 = scmp.ne.s32.totalorder %s29, %s32
      %p38 = scmp.eq.s32.totalorder %s19, 0
      %p39 = por %p37, %p38
      %p40 = scmp.ne.s32.totalorder %s29, %s32
      %p41 = scmp.eq.s32.totalorder %s24, 1
      %p42 = por %p40, %p41
      %p43 = scmp.ne.s32.totalorder %s32, %s33
      %p44 = scmp.eq.s32.totalorder %s24, 0
      %p45 = por %p43, %p44
      %p46 = scmp.ne.s32.totalorder %s32, %s33
      %p47 = scmp.eq.s32.totalorder %s25, 1
      %p48 = por %p46, %p47
      %p50 = scmp.ne.s32.totalorder %s33, %s49
      %p51 = scmp.eq.s32.totalorder %s25, 0
      %p52 = por %p50, %p51
      %s53 = ssub.s32 %s19, %s26
      %p54 = scmp.eq.s32.totalorder %s53, 0
      %s56 = sadd.s32 %s55, 1
      %s57 = scalar_select %p54, %s55, %s56
      %p60 = pneg %p54
      %p61 = scmp.eq.s32.totalorder %s19, 1
      %p62 = por %p60, %p61
      %p63 = scmp.ne.s32.totalorder %s55, %s58
      %p64 = scmp.eq.s32.totalorder %s19, 0
      %p65 = por %p63, %p64
      %p66 = scmp.ne.s32.totalorder %s55, %s58
      %p67 = scmp.eq.s32.totalorder %s24, 1
      %p68 = por %p66, %p67
      %p69 = scmp.ne.s32.totalorder %s58, %s59
      %p70 = scmp.eq.s32.totalorder %s24, 0
      %p71 = por %p69, %p70
      %p72 = scmp.ne.s32.totalorder %s58, %s59
      %p73 = scmp.eq.s32.totalorder %s25, 1
      %p74 = por %p72, %p73
      %p76 = scmp.ne.s32.totalorder %s59, %s75
      %p77 = scmp.eq.s32.totalorder %s25, 0
      %p78 = por %p76, %p77
      %s80 = sadd.s32 %s79, 1
      %p83 = scmp.eq.s32.totalorder %s19, 1
      %p84 = scmp.ne.s32.totalorder %s79, %s81
      %p85 = scmp.eq.s32.totalorder %s19, 0
      %p86 = por %p84, %p85
      %p87 = scmp.ne.s32.totalorder %s79, %s81
      %p88 = scmp.eq.s32.totalorder %s24, 1
      %p89 = por %p87, %p88
      %p90 = scmp.ne.s32.totalorder %s81, %s82
      %p91 = scmp.eq.s32.totalorder %s24, 0
      %p92 = por %p90, %p91
      %p93 = scmp.ne.s32.totalorder %s81, %s82
      %p94 = scmp.eq.s32.totalorder %s25, 1
      %p95 = por %p93, %p94
      %p97 = scmp.ne.s32.totalorder %s82, %s96
      %p98 = scmp.eq.s32.totalorder %s25, 0
      %p99 = por %p97, %p98
      %s101 = sadd.s32 %s100, 1
      %p104 = scmp.eq.s32.totalorder %s19, 1
      %p105 = scmp.ne.s32.totalorder %s100, %s102
      %p106 = scmp.eq.s32.totalorder %s19, 0
      %p107 = por %p105, %p106
      %p108 = scmp.ne.s32.totalorder %s100, %s102
      %p109 = scmp.eq.s32.totalorder %s24, 1
      %p110 = por %p108, %p109
      %p111 = scmp.ne.s32.totalorder %s102, %s103
      %p112 = scmp.eq.s32.totalorder %s24, 0
      %p113 = por %p111, %p112
      %p114 = scmp.ne.s32.totalorder %s102, %s103
      %p115 = scmp.eq.s32.totalorder %s25, 1
      %p116 = por %p114, %p115
      %p118 = scmp.ne.s32.totalorder %s103, %s117
      %p119 = scmp.eq.s32.totalorder %s25, 0
      %p120 = por %p118, %p119
      %s121 = ssub.s32 %s19, %s26
      %p122 = scmp.eq.s32.totalorder %s121, 0
      %s124 = sadd.s32 %s123, 1
      %s125 = scalar_select %p122, %s123, %s124
      %p128 = pneg %p122
      %p129 = scmp.eq.s32.totalorder %s19, 1
      %p130 = por %p128, %p129
      %p131 = scmp.ne.s32.totalorder %s123, %s126
      %p132 = scmp.eq.s32.totalorder %s19, 0
      %p133 = por %p131, %p132
      %p134 = scmp.ne.s32.totalorder %s123, %s126
      %p135 = scmp.eq.s32.totalorder %s24, 1
      %p136 = por %p134, %p135
      %p137 = scmp.ne.s32.totalorder %s126, %s127
      %p138 = scmp.eq.s32.totalorder %s24, 0
      %p139 = por %p137, %p138
      %p140 = scmp.ne.s32.totalorder %s126, %s127
      %p141 = scmp.eq.s32.totalorder %s25, 1
      %p142 = por %p140, %p141
      %p144 = scmp.ne.s32.totalorder %s127, %s143
      %p145 = scmp.eq.s32.totalorder %s25, 0
      %p146 = por %p144, %p145
      %p147 = scmp.le.s32.totalorder 1, %s19
      %p148 = scmp.lt.s32.totalorder %s19, 3
      %p149 = pnand %p147, %p148
      %p150 = pneg %p149
      // Predicated region
      $region9: #{tpu_custom_call.1} parent=5 // pred_check
        _
      $region10: #{tpu_custom_call.1} parent=5 // pred_check_branch
        %152 = sbr.rel (%p149) target = $region12
      $region11: #{tpu_custom_call.1} parent=5 // pred_region
        %s153 = ssub.s32 %s19, 1
        // Predicated region
        $region13: #{tpu_custom_call.1} parent=11 // pred_check
          %p154 = pneg %p92
        $region14: #{tpu_custom_call.1} parent=11 // pred_check_branch
          %156 = sbr.rel (%p154) target = $region16
        $region15: #{tpu_custom_call.1} parent=11 // pred_region
          %158 = vsyncadd [#allocation6], 0
          %s159 = sshll.u32 %s2, 4
          %s160 = int_to_ptr.hbm [resolvable:$true] %s159
          %s161 = sshll.u32 [#allocation7], 4
          %s162 = int_to_ptr.vmem [resolvable:$true] %s161
          %167 = dma.hbm_to_vmem [thread:$0]  %s160, 1024, %s162, [#allocation6], 128, 128, 8
        $region16: #{tpu_custom_call.1} parent=11 // pred_fallthru
          _
        // Predicated region
        $region17: #{tpu_custom_call.1} parent=11 // pred_check
          %p168 = pneg %p113
        $region18: #{tpu_custom_call.1} parent=11 // pred_check_branch
          %170 = sbr.rel (%p168) target = $region20
        $region19: #{tpu_custom_call.1} parent=11 // pred_region
          _
        $region20: #{tpu_custom_call.1} parent=11 // pred_fallthru
          _
      $region12: #{tpu_custom_call.1} parent=5 // pred_fallthru
        _
      %p171 = scmp.lt.s32.totalorder %s19, 2
      // Predicated region
      $region21: #{tpu_custom_call.1} parent=5 // pred_check
        %p172 = pneg %p171
      $region22: #{tpu_custom_call.1} parent=5 // pred_check_branch
        %174 = sbr.rel (%p172) target = $region24
      $region23: #{tpu_custom_call.1} parent=5 // pred_region
        // Predicated region
        $region25: #{tpu_custom_call.1} parent=23 // pred_check
          %p175 = pneg %p39
        $region26: #{tpu_custom_call.1} parent=23 // pred_check_branch
          %177 = sbr.rel (%p175) target = $region28
        $region27: #{tpu_custom_call.1} parent=23 // pred_region
          %s178 = sand.u32 %s29, 1
          %s179 = scalar_lea.sflag [#allocation3], %s178
          %s180 = sand.u32 %s29, 1
          %s181 = smul.addr %s180, 8
          %s182 = scalar_lea.vmem [#allocation2], %s181
          %184 = vsyncadd %s179, 0
          %s185 = smul.addr %s19, 8
          %s186 = scalar_lea.hbm %s0, %s185
          %s188 = sshll.u32 %s186, 4
          %s189 = int_to_ptr.hbm [resolvable:$true] %s188
          %s190 = sshll.u32 %s182, 4
          %s191 = int_to_ptr.vmem [resolvable:$true] %s190
          %193 = dma.hbm_to_vmem [thread:$0]  %s189, 128, %s191, %s179
        $region28: #{tpu_custom_call.1} parent=23 // pred_fallthru
          _
        // Predicated region
        $region29: #{tpu_custom_call.1} parent=23 // pred_check
          %p194 = pneg %p65
        $region30: #{tpu_custom_call.1} parent=23 // pred_check_branch
          %196 = sbr.rel (%p194) target = $region32
        $region31: #{tpu_custom_call.1} parent=23 // pred_region
          %s197 = sand.u32 %s19, 1
          %s198 = scalar_lea.sflag [#allocation6], %s197
          %s199 = sand.u32 %s55, 1
          %s200 = smul.addr %s199, 8
          %s201 = scalar_lea.vmem [#allocation5], %s200
          %203 = vsyncadd %s198, 0
          %s204 = smul.addr %s19, 8
          %s205 = scalar_lea.hbm %s1, %s204
          %s207 = sshll.u32 %s205, 4
          %s208 = int_to_ptr.hbm [resolvable:$true] %s207
          %s209 = sshll.u32 %s201, 4
          %s210 = int_to_ptr.vmem [resolvable:$true] %s209
          %212 = dma.hbm_to_vmem [thread:$0]  %s208, 128, %s210, %s198
        $region32: #{tpu_custom_call.1} parent=23 // pred_fallthru
          _
      $region24: #{tpu_custom_call.1} parent=5 // pred_fallthru
        _
      %p213 = scmp.le.s32.totalorder 1, %s19
      %p214 = scmp.lt.s32.totalorder %s19, 3
      %p215 = pnand %p213, %p214
      %p216 = pneg %p215
      // Predicated region
      $region33: #{tpu_custom_call.1} parent=5 // pred_check
        _
      $region34: #{tpu_custom_call.1} parent=5 // pred_check_branch
        %218 = sbr.rel (%p215) target = $region36
      $region35: #{tpu_custom_call.1} parent=5 // pred_region
        %s219 = ssub.s32 %s19, 1
        %s220 = sand.u32 %s32, 1
        %s221 = scalar_lea.sflag [#allocation3], %s220
        %s222 = sand.u32 %s32, 1
        %s223 = smul.addr %s222, 8
        %s224 = scalar_lea.vmem [#allocation2], %s223
        // Predicated region
        $region37: #{tpu_custom_call.1} parent=35 // pred_check
          %p225 = pneg %p45
        $region38: #{tpu_custom_call.1} parent=35 // pred_check_branch
          %227 = sbr.rel (%p225) target = $region40
        $region39: #{tpu_custom_call.1} parent=35 // pred_region
          %229 = dma.done %s221, 128
        $region40: #{tpu_custom_call.1} parent=35 // pred_fallthru
          _
        %s230 = sand.u32 %s24, 1
        %s231 = scalar_lea.sflag [#allocation6], %s230
        %s232 = sand.u32 %s58, 1
        %s233 = smul.addr %s232, 8
        %s234 = scalar_lea.vmem [#allocation5], %s233
        // Predicated region
        $region41: #{tpu_custom_call.1} parent=35 // pred_check
          %p235 = pneg %p71
        $region42: #{tpu_custom_call.1} parent=35 // pred_check_branch
          %237 = sbr.rel (%p235) target = $region44
        $region43: #{tpu_custom_call.1} parent=35 // pred_region
          %239 = dma.done %s231, 128
        $region44: #{tpu_custom_call.1} parent=35 // pred_fallthru
          _
        // Predicated region
        $region45: #{tpu_custom_call.1} parent=35 // pred_check
          %p240 = pneg %p92
        $region46: #{tpu_custom_call.1} parent=35 // pred_check_branch
          %242 = sbr.rel (%p240) target = $region48
        $region47: #{tpu_custom_call.1} parent=35 // pred_region
          %244 = dma.done [#allocation6], 1024
        $region48: #{tpu_custom_call.1} parent=35 // pred_fallthru
          _
        %s245 = sand.u32 %s32, 1
        %s246 = scalar_lea.sflag [#allocation3], %s245
        %s247 = sand.u32 %s32, 1
        %s248 = smul.addr %s247, 8
        %s249 = scalar_lea.vmem [#allocation2], %s248
        %p250 = pneg %p45
        %p251 = pneg %p42
        %s252 = sand.u32 %s24, 1
        %s253 = scalar_lea.sflag [#allocation6], %s252
        %s254 = sand.u32 %s58, 1
        %s255 = smul.addr %s254, 8
        %s256 = scalar_lea.vmem [#allocation5], %s255
        %p257 = pneg %p71
        %p258 = pneg %p68
        %p259 = pneg %p92
        %p260 = pneg %p89
        %p261 = pneg %p113
        %p262 = pneg %p110
        %p263 = pneg %p139
        %p264 = pneg %p136
        %s265 = sand.u32 %s126, 1
        %s266 = scalar_lea.sflag [#allocation4], %s265
        %s267 = sand.u32 %s126, 1
        %s268 = smul.addr %s267, 8
        %s269 = scalar_lea.vmem [#allocation8], %s268
        %v270 = vld [vmem:[%s224] sm:$0xff]
        %v271 = vld [vmem:[#allocation7] sm:$0xff]
        %v272 = vld [vmem:[#allocation7 + $0x8] sm:$0xff]
        %v273 = vld [vmem:[#allocation7 + $0x10] sm:$0xff]
        %v274 = vld [vmem:[#allocation7 + $0x18] sm:$0xff]
        %v275 = vld [vmem:[%s234] sm:$0xff]
        %s276 = scalar_lea.vmem [#allocation7], 32
        %v277 = vld [vmem:[%s276] sm:$0xff]
        %v278 = vld [vmem:[%s276 + $0x8] sm:$0xff]
        %v279 = vld [vmem:[%s276 + $0x10] sm:$0xff]
        %v280 = vld [vmem:[%s276 + $0x18] sm:$0xff]
        %vm281 = vcmask 261120
        %v283 = vsel %vm281, %v275, 0
        %285 = vmatpush.msra.mxu0 0.0
        %286 = vmatpush.msra.mxu0 0.0
        %287 = vmatpush.msra.mxu0 0.0
        %288 = vmatpush.msra.mxu0 0.0
        %289 = vmatpush.msra.mxu0 0.0
        %290 = vmatpush.msra.mxu0 0.0
        %291 = vmatpush.msra.mxu0 0.0
        %292 = vmatpush.msra.mxu0 0.0
        %293 = vmatpush.msra.mxu0 0.0
        %294 = vmatpush.msra.mxu0 0.0
        %295 = vmatpush.msra.mxu0 0.0
        %296 = vmatpush.msra.mxu0 0.0
        %297 = vmatpush.msra.mxu0 %v280
        %298 = vmatpush.msra.mxu0 %v279
        %299 = vmatpush.msra.mxu0 %v278
        %300 = vmatpush.msra.mxu0 %v277
        %301 = vmatmul.f32.gmra.mxu0 %v283
        %v302 = vpop.f32.mrf.mxu0
        %v303 = vadd.f32 0.0, %v302
        %304 = vdwg.mxu0
        %v306 = vsel %vm281, %v270, 0
        %308 = vmatpush.msra.mxu0 0.0
        %309 = vmatpush.msra.mxu0 0.0
        %310 = vmatpush.msra.mxu0 0.0
        %311 = vmatpush.msra.mxu0 0.0
        %312 = vmatpush.msra.mxu0 0.0
        %313 = vmatpush.msra.mxu0 0.0
        %314 = vmatpush.msra.mxu0 0.0
        %315 = vmatpush.msra.mxu0 0.0
        %316 = vmatpush.msra.mxu0 0.0
        %317 = vmatpush.msra.mxu0 0.0
        %318 = vmatpush.msra.mxu0 0.0
        %319 = vmatpush.msra.mxu0 0.0
        %320 = vmatpush.msra.mxu0 %v274
        %321 = vmatpush.msra.mxu0 %v273
        %322 = vmatpush.msra.mxu0 %v272
        %323 = vmatpush.msra.mxu0 %v271
        %324 = vmatmul.f32.gmra.mxu0 %v306
        %v325 = vpop.f32.mrf.mxu0
        %v326 = vadd.f32 %v303, %v325
        %327 = vdwg.mxu0
        %v328 = vld [vmem:[%s3] sm:$0x1]
        %v330 = vperm.slane %v328, 0
        %v332 = vadd.f32 %v326, %v330
        %333 = vst [vmem:[%s269] sm:$0xff] %v332
        %s334 = sand.u32 %s126, 1
        %s335 = scalar_lea.sflag [#allocation4], %s334
        %s336 = sand.u32 %s126, 1
        %s337 = smul.addr %s336, 8
        %s338 = scalar_lea.vmem [#allocation8], %s337
        // Predicated region
        $region49: #{tpu_custom_call.1} parent=35 // pred_check
          %p339 = pneg %p136
        $region50: #{tpu_custom_call.1} parent=35 // pred_check_branch
          %341 = sbr.rel (%p339) target = $region52
        $region51: #{tpu_custom_call.1} parent=35 // pred_region
          %343 = vsyncadd %s335, 0
          %s344 = smul.addr %s24, 8
          %s345 = scalar_lea.hbm %s4, %s344
          %s347 = sshll.u32 %s338, 4
          %s348 = int_to_ptr.vmem [resolvable:$true] %s347
          %s349 = sshll.u32 %s345, 4
          %s350 = int_to_ptr.hbm [resolvable:$true] %s349
          %352 = dma.vmem_to_hbm [thread:$0]  %s348, 128, %s350, %s335
        $region52: #{tpu_custom_call.1} parent=35 // pred_fallthru
          _
      $region36: #{tpu_custom_call.1} parent=5 // pred_fallthru
        _
      %p353 = scmp.le.s32.totalorder 2, %s19
      // Predicated region
      $region53: #{tpu_custom_call.1} parent=5 // pred_check
        %p354 = pneg %p353
      $region54: #{tpu_custom_call.1} parent=5 // pred_check_branch
        %356 = sbr.rel (%p354) target = $region56
      $region55: #{tpu_custom_call.1} parent=5 // pred_region
        %s357 = ssub.s32 %s19, 2
        // Predicated region
        $region57: #{tpu_custom_call.1} parent=55 // pred_check
          %p358 = pneg %p142
        $region58: #{tpu_custom_call.1} parent=55 // pred_check_branch
          %360 = sbr.rel (%p358) target = $region60
        $region59: #{tpu_custom_call.1} parent=55 // pred_region
          %s361 = sand.u32 %s127, 1
          %s362 = scalar_lea.sflag [#allocation4], %s361
          %s363 = sand.u32 %s127, 1
          %s364 = smul.addr %s363, 8
          %s365 = scalar_lea.vmem [#allocation8], %s364
          %367 = dma.done %s362, 128
        $region60: #{tpu_custom_call.1} parent=55 // pred_fallthru
          _
      $region56: #{tpu_custom_call.1} parent=5 // pred_fallthru
        _
    $region6: #{tpu_custom_call.1} parent=1 // loop_footer
      %s23 = sadd.s32 1, %s19
    $region7: #{tpu_custom_call.1} parent=1 // loop_footer_branch
      %18 = sbr.rel target = $region3
    $region8: #{tpu_custom_call.1} parent=1 // loop_exit
      _
    %368 = vsyncpa [#allocation3], 1
    %s369 = scalar_lea.sflag [#allocation3], 1
    %370 = vsyncpa %s369, 1
    %371 = vsyncpa [#allocation6], 1
    %s372 = scalar_lea.sflag [#allocation6], 1
    %373 = vsyncpa %s372, 1
    %374 = vsyncpa [#allocation4], 1
    %s375 = scalar_lea.sflag [#allocation4], 1
    %376 = vsyncpa %s375, 1

// kernel: tpu_custom_call.1
$region0: #{tpu_custom_call.1}
  #allocation0 [shape = 'u32[]', space=smem, size = 0x4, offset = 0x4, fixed_abs, tag = 'smem constant byte address 0x4 - core index']
  #allocation1 [shape = 'u32[72,128]{1,0:T(1,128)}', space=vmem, size = 0x9000, scoped, tag = 'internal scratch']
  %s0 = inlined_call_operand.hbm [shape: f32[16,32], index: 0, kind: input, shape index: {}]
  %s1 = inlined_call_operand.hbm [shape: f32[16,32], index: 1, kind: input, shape index: {}]
  %s2 = inlined_call_operand.hbm [shape: f32[3,32,128], index: 2, kind: input, shape index: {}]
  %s3 = inlined_call_operand.vmem [shape: f32[1,128], index: 3, kind: input, shape index: {}]
  %s4 = inlined_call_operand.hbm [shape: f32[16,128], index: 4, kind: output, shape index: {}]
  %s5 = sld [smem:[#allocation0]]
  $region61: #{tpu_custom_call.1} parent=0
    _
  %s7 = ssub.s32 1, %s5
  %s8 = scalar_select 0, %s7, %s5
  $region1: #{tpu_custom_call.1} parent=0
    #allocation2 [shape = 'u8[8192]{0}', space=vmem, size = 0x2000, scoped, tag = 'input window, operand 0']
    #allocation3 [shape = 's32[2]{0}', space=sflag, size = 0x8, scoped, tag = 'scoped memory for tpu_custom_call.1']
    #allocation4 [shape = 's32[2]{0}', space=sflag, size = 0x8, scoped, tag = 'scoped memory for tpu_custom_call.1']
    #allocation5 [shape = 'u8[8192]{0}', space=vmem, size = 0x2000, scoped, tag = 'input window, operand 1']
    #allocation6 [shape = 's32[2]{0}', space=sflag, size = 0x8, scoped, tag = 'scoped memory for tpu_custom_call.1']
    #allocation7 [shape = 'u8[32768]{0}', space=vmem, size = 0x8000, scoped, tag = 'input window, operand 2, single buffered']
    #allocation8 [shape = 'u8[8192]{0}', space=vmem, size = 0x2000, scoped, tag = 'output window, operand 0']
    %9 = vsyncpa [#allocation3], 0
    %s10 = scalar_lea.sflag [#allocation3], 1
    %11 = vsyncpa %s10, 0
    %12 = vsyncpa [#allocation6], 0
    %s13 = scalar_lea.sflag [#allocation6], 1
    %14 = vsyncpa %s13, 0
    %15 = vsyncpa [#allocation4], 0
    %s16 = scalar_lea.sflag [#allocation4], 1
    %17 = vsyncpa %s16, 0
    loop: start=0, step=1, limit=4
    $region2: #{tpu_custom_call.1} parent=1 // loop_pre_header
      _
    $region3: #{tpu_custom_call.1} parent=1 // loop_header
      %s19 = sphi 0, %s23
      %p20 = scmp.ge.s32.totalorder %s19, 4
      %s29 = sphi 0, %s31
      %s32 = sphi 0, %s29
      %s33 = sphi 0, %s32
      %s49 = sphi 0, %s33
      %s55 = sphi 0, %s57
      %s58 = sphi 0, %s55
      %s59 = sphi 0, %s58
      %s75 = sphi 0, %s59
      %s79 = sphi 0, %s79
      %s81 = sphi 0, %s79
      %s82 = sphi 0, %s81
      %s96 = sphi 0, %s82
      %s100 = sphi 0, %s100
      %s102 = sphi 0, %s100
      %s103 = sphi 0, %s102
      %s117 = sphi 0, %s103
      %s123 = sphi 0, %s125
      %s126 = sphi 0, %s123
      %s127 = sphi 0, %s126
      %s143 = sphi 0, %s127
    $region4: #{tpu_custom_call.1} parent=1 // loop_header_branch
      %22 = sbr.rel (%p20) target = $region8
    $region5: #{tpu_custom_call.1} parent=1 // loop_body
      %s24 = ssub.s32 %s19, 1
      %s25 = ssub.s32 %s19, 2
      %s26 = sadd.s32 %s19, 1
      %s27 = ssub.s32 %s19, %s26
      %p28 = scmp.eq.s32.totalorder %s27, 0
      %s30 = sadd.s32 %s29, 1
      %s31 = scalar_select %p28, %s29, %s30
      %p34 = pneg %p28
      %p35 = scmp.eq.s32.totalorder %s19, 1
      %p36 = por %p34, %p35
      %p37 = scmp.ne.s32.totalorder %s29, %s32
      %p38 = scmp.eq.s32.totalorder %s19, 0
      %p39 = por %p37, %p38
      %p40 = scmp.ne.s32.totalorder %s29, %s32
      %p41 = scmp.eq.s32.totalorder %s24, 1
      %p42 = por %p40, %p41
      %p43 = scmp.ne.s32.totalorder %s32, %s33
      %p44 = scmp.eq.s32.totalorder %s24, 0
      %p45 = por %p43, %p44
      %p46 = scmp.ne.s32.totalorder %s32, %s33
      %p47 = scmp.eq.s32.totalorder %s25, 1
      %p48 = por %p46, %p47
      %p50 = scmp.ne.s32.totalorder %s33, %s49
      %p51 = scmp.eq.s32.totalorder %s25, 0
      %p52 = por %p50, %p51
      %s53 = ssub.s32 %s19, %s26
      %p54 = scmp.eq.s32.totalorder %s53, 0
      %s56 = sadd.s32 %s55, 1
      %s57 = scalar_select %p54, %s55, %s56
      %p60 = pneg %p54
      %p61 = scmp.eq.s32.totalorder %s19, 1
      %p62 = por %p60, %p61
      %p63 = scmp.ne.s32.totalorder %s55, %s58
      %p64 = scmp.eq.s32.totalorder %s19, 0
      %p65 = por %p63, %p64
      %p66 = scmp.ne.s32.totalorder %s55, %s58
      %p67 = scmp.eq.s32.totalorder %s24, 1
      %p68 = por %p66, %p67
      %p69 = scmp.ne.s32.totalorder %s58, %s59
      %p70 = scmp.eq.s32.totalorder %s24, 0
      %p71 = por %p69, %p70
      %p72 = scmp.ne.s32.totalorder %s58, %s59
      %p73 = scmp.eq.s32.totalorder %s25, 1
      %p74 = por %p72, %p73
      %p76 = scmp.ne.s32.totalorder %s59, %s75
      %p77 = scmp.eq.s32.totalorder %s25, 0
      %p78 = por %p76, %p77
      %s80 = sadd.s32 %s79, 1
      %p83 = scmp.eq.s32.totalorder %s19, 1
      %p84 = scmp.ne.s32.totalorder %s79, %s81
      %p85 = scmp.eq.s32.totalorder %s19, 0
      %p86 = por %p84, %p85
      %p87 = scmp.ne.s32.totalorder %s79, %s81
      %p88 = scmp.eq.s32.totalorder %s24, 1
      %p89 = por %p87, %p88
      %p90 = scmp.ne.s32.totalorder %s81, %s82
      %p91 = scmp.eq.s32.totalorder %s24, 0
      %p92 = por %p90, %p91
      %p93 = scmp.ne.s32.totalorder %s81, %s82
      %p94 = scmp.eq.s32.totalorder %s25, 1
      %p95 = por %p93, %p94
      %p97 = scmp.ne.s32.totalorder %s82, %s96
      %p98 = scmp.eq.s32.totalorder %s25, 0
      %p99 = por %p97, %p98
      %s101 = sadd.s32 %s100, 1
      %p104 = scmp.eq.s32.totalorder %s19, 1
      %p105 = scmp.ne.s32.totalorder %s100, %s102
      %p106 = scmp.eq.s32.totalorder %s19, 0
      %p107 = por %p105, %p106
      %p108 = scmp.ne.s32.totalorder %s100, %s102
      %p109 = scmp.eq.s32.totalorder %s24, 1
      %p110 = por %p108, %p109
      %p111 = scmp.ne.s32.totalorder %s102, %s103
      %p112 = scmp.eq.s32.totalorder %s24, 0
      %p113 = por %p111, %p112
      %p114 = scmp.ne.s32.totalorder %s102, %s103
      %p115 = scmp.eq.s32.totalorder %s25, 1
      %p116 = por %p114, %p115
      %p118 = scmp.ne.s32.totalorder %s103, %s117
      %p119 = scmp.eq.s32.totalorder %s25, 0
      %p120 = por %p118, %p119
      %s121 = ssub.s32 %s19, %s26
      %p122 = scmp.eq.s32.totalorder %s121, 0
      %s124 = sadd.s32 %s123, 1
      %s125 = scalar_select %p122, %s123, %s124
      %p128 = pneg %p122
      %p129 = scmp.eq.s32.totalorder %s19, 1
      %p130 = por %p128, %p129
      %p131 = scmp.ne.s32.totalorder %s123, %s126
      %p132 = scmp.eq.s32.totalorder %s19, 0
      %p133 = por %p131, %p132
      %p134 = scmp.ne.s32.totalorder %s123, %s126
      %p135 = scmp.eq.s32.totalorder %s24, 1
      %p136 = por %p134, %p135
      %p137 = scmp.ne.s32.totalorder %s126, %s127
      %p138 = scmp.eq.s32.totalorder %s24, 0
      %p139 = por %p137, %p138
      %p140 = scmp.ne.s32.totalorder %s126, %s127
      %p141 = scmp.eq.s32.totalorder %s25, 1
      %p142 = por %p140, %p141
      %p144 = scmp.ne.s32.totalorder %s127, %s143
      %p145 = scmp.eq.s32.totalorder %s25, 0
      %p146 = por %p144, %p145
      %p147 = scmp.le.s32.totalorder 1, %s19
      %p148 = scmp.lt.s32.totalorder %s19, 3
      %p149 = pnand %p147, %p148
      %p150 = pneg %p149
      // Predicated region
      $region9: #{tpu_custom_call.1} parent=5 // pred_check
        _
      $region10: #{tpu_custom_call.1} parent=5 // pred_check_branch
        %152 = sbr.rel (%p149) target = $region12
      $region11: #{tpu_custom_call.1} parent=5 // pred_region
        %s153 = ssub.s32 %s19, 1
        // Predicated region
        $region13: #{tpu_custom_call.1} parent=11 // pred_check
          %p154 = pneg %p92
        $region14: #{tpu_custom_call.1} parent=11 // pred_check_branch
          %156 = sbr.rel (%p154) target = $region16
        $region15: #{tpu_custom_call.1} parent=11 // pred_region
          %158 = vsyncadd [#allocation6], 0
          %s159 = sshll.u32 %s2, 4
          %s160 = int_to_ptr.hbm [resolvable:$true] %s159
          %s161 = sshll.u32 [#allocation7], 4
          %s162 = int_to_ptr.vmem [resolvable:$true] %s161
          %167 = dma.hbm_to_vmem [thread:$0]  %s160, 1024, %s162, [#allocation6], 128, 128, 8
        $region16: #{tpu_custom_call.1} parent=11 // pred_fallthru
          _
        // Predicated region
        $region17: #{tpu_custom_call.1} parent=11 // pred_check
          %p168 = pneg %p113
        $region18: #{tpu_custom_call.1} parent=11 // pred_check_branch
          %170 = sbr.rel (%p168) target = $region20
        $region19: #{tpu_custom_call.1} parent=11 // pred_region
          _
        $region20: #{tpu_custom_call.1} parent=11 // pred_fallthru
          _
      $region12: #{tpu_custom_call.1} parent=5 // pred_fallthru
        _
      %p171 = scmp.lt.s32.totalorder %s19, 2
      // Predicated region
      $region21: #{tpu_custom_call.1} parent=5 // pred_check
        %p172 = pneg %p171
      $region22: #{tpu_custom_call.1} parent=5 // pred_check_branch
        %174 = sbr.rel (%p172) target = $region24
      $region23: #{tpu_custom_call.1} parent=5 // pred_region
        // Predicated region
        $region25: #{tpu_custom_call.1} parent=23 // pred_check
          %p175 = pneg %p39
        $region26: #{tpu_custom_call.1} parent=23 // pred_check_branch
          %177 = sbr.rel (%p175) target = $region28
        $region27: #{tpu_custom_call.1} parent=23 // pred_region
          %s178 = sand.u32 %s29, 1
          %s179 = scalar_lea.sflag [#allocation3], %s178
          %s180 = sand.u32 %s29, 1
          %s181 = smul.addr %s180, 8
          %s182 = scalar_lea.vmem [#allocation2], %s181
          %184 = vsyncadd %s179, 0
          %s185 = smul.addr %s19, 8
          %s186 = scalar_lea.hbm %s0, %s185
          %s188 = sshll.u32 %s186, 4
          %s189 = int_to_ptr.hbm [resolvable:$true] %s188
          %s190 = sshll.u32 %s182, 4
          %s191 = int_to_ptr.vmem [resolvable:$true] %s190
          %193 = dma.hbm_to_vmem [thread:$0]  %s189, 128, %s191, %s179
        $region28: #{tpu_custom_call.1} parent=23 // pred_fallthru
          _
        // Predicated region
        $region29: #{tpu_custom_call.1} parent=23 // pred_check
          %p194 = pneg %p65
        $region30: #{tpu_custom_call.1} parent=23 // pred_check_branch
          %196 = sbr.rel (%p194) target = $region32
        $region31: #{tpu_custom_call.1} parent=23 // pred_region
          %s197 = sand.u32 %s19, 1
          %s198 = scalar_lea.sflag [#allocation6], %s197
          %s199 = sand.u32 %s55, 1
          %s200 = smul.addr %s199, 8
          %s201 = scalar_lea.vmem [#allocation5], %s200
          %203 = vsyncadd %s198, 0
          %s204 = smul.addr %s19, 8
          %s205 = scalar_lea.hbm %s1, %s204
          %s207 = sshll.u32 %s205, 4
          %s208 = int_to_ptr.hbm [resolvable:$true] %s207
          %s209 = sshll.u32 %s201, 4
          %s210 = int_to_ptr.vmem [resolvable:$true] %s209
          %212 = dma.hbm_to_vmem [thread:$0]  %s208, 128, %s210, %s198
        $region32: #{tpu_custom_call.1} parent=23 // pred_fallthru
          _
      $region24: #{tpu_custom_call.1} parent=5 // pred_fallthru
        _
      %p213 = scmp.le.s32.totalorder 1, %s19
      %p214 = scmp.lt.s32.totalorder %s19, 3
      %p215 = pnand %p213, %p214
      %p216 = pneg %p215
      // Predicated region
      $region33: #{tpu_custom_call.1} parent=5 // pred_check
        _
      $region34: #{tpu_custom_call.1} parent=5 // pred_check_branch
        %218 = sbr.rel (%p215) target = $region36
      $region35: #{tpu_custom_call.1} parent=5 // pred_region
        %s219 = ssub.s32 %s19, 1
        %s220 = sand.u32 %s32, 1
        %s221 = scalar_lea.sflag [#allocation3], %s220
        %s222 = sand.u32 %s32, 1
        %s223 = smul.addr %s222, 8
        %s224 = scalar_lea.vmem [#allocation2], %s223
        // Predicated region
        $region37: #{tpu_custom_call.1} parent=35 // pred_check
          %p225 = pneg %p45
        $region38: #{tpu_custom_call.1} parent=35 // pred_check_branch
          %227 = sbr.rel (%p225) target = $region40
        $region39: #{tpu_custom_call.1} parent=35 // pred_region
          %229 = dma.done %s221, 128
        $region40: #{tpu_custom_call.1} parent=35 // pred_fallthru
          _
        %s230 = sand.u32 %s24, 1
        %s231 = scalar_lea.sflag [#allocation6], %s230
        %s232 = sand.u32 %s58, 1
        %s233 = smul.addr %s232, 8
        %s234 = scalar_lea.vmem [#allocation5], %s233
        // Predicated region
        $region41: #{tpu_custom_call.1} parent=35 // pred_check
          %p235 = pneg %p71
        $region42: #{tpu_custom_call.1} parent=35 // pred_check_branch
          %237 = sbr.rel (%p235) target = $region44
        $region43: #{tpu_custom_call.1} parent=35 // pred_region
          %239 = dma.done %s231, 128
        $region44: #{tpu_custom_call.1} parent=35 // pred_fallthru
          _
        // Predicated region
        $region45: #{tpu_custom_call.1} parent=35 // pred_check
          %p240 = pneg %p92
        $region46: #{tpu_custom_call.1} parent=35 // pred_check_branch
          %242 = sbr.rel (%p240) target = $region48
        $region47: #{tpu_custom_call.1} parent=35 // pred_region
          %244 = dma.done [#allocation6], 1024
        $region48: #{tpu_custom_call.1} parent=35 // pred_fallthru
          _
        %s245 = sand.u32 %s32, 1
        %s246 = scalar_lea.sflag [#allocation3], %s245
        %s247 = sand.u32 %s32, 1
        %s248 = smul.addr %s247, 8
        %s249 = scalar_lea.vmem [#allocation2], %s248
        %p250 = pneg %p45
        %p251 = pneg %p42
        %s252 = sand.u32 %s24, 1
        %s253 = scalar_lea.sflag [#allocation6], %s252
        %s254 = sand.u32 %s58, 1
        %s255 = smul.addr %s254, 8
        %s256 = scalar_lea.vmem [#allocation5], %s255
        %p257 = pneg %p71
        %p258 = pneg %p68
        %p259 = pneg %p92
        %p260 = pneg %p89
        %p261 = pneg %p113
        %p262 = pneg %p110
        %p263 = pneg %p139
        %p264 = pneg %p136
        %s265 = sand.u32 %s126, 1
        %s266 = scalar_lea.sflag [#allocation4], %s265
        %s267 = sand.u32 %s126, 1
        %s268 = smul.addr %s267, 8
        %s269 = scalar_lea.vmem [#allocation8], %s268
        %v270 = vld [vmem:[%s224] sm:$0xff]
        %v271 = vld [vmem:[#allocation7] sm:$0xff]
        %v272 = vld [vmem:[#allocation7 + $0x8] sm:$0xff]
        %v273 = vld [vmem:[#allocation7 + $0x10] sm:$0xff]
        %v274 = vld [vmem:[#allocation7 + $0x18] sm:$0xff]
        %v275 = vld [vmem:[%s234] sm:$0xff]
        %s276 = scalar_lea.vmem [#allocation7], 32
        %v277 = vld [vmem:[%s276] sm:$0xff]
        %v278 = vld [vmem:[%s276 + $0x8] sm:$0xff]
        %v279 = vld [vmem:[%s276 + $0x10] sm:$0xff]
        %v280 = vld [vmem:[%s276 + $0x18] sm:$0xff]
        %vm281 = vcmask 261120
        %v283 = vsel %vm281, %v275, 0
        %285 = vmatpush.msra.mxu0 0.0
        %286 = vmatpush.msra.mxu0 0.0
        %287 = vmatpush.msra.mxu0 0.0
        %288 = vmatpush.msra.mxu0 0.0
        %289 = vmatpush.msra.mxu0 0.0
        %290 = vmatpush.msra.mxu0 0.0
        %291 = vmatpush.msra.mxu0 0.0
        %292 = vmatpush.msra.mxu0 0.0
        %293 = vmatpush.msra.mxu0 0.0
        %294 = vmatpush.msra.mxu0 0.0
        %295 = vmatpush.msra.mxu0 0.0
        %296 = vmatpush.msra.mxu0 0.0
        %297 = vmatpush.msra.mxu0 %v280
        %298 = vmatpush.msra.mxu0 %v279
        %299 = vmatpush.msra.mxu0 %v278
        %300 = vmatpush.msra.mxu0 %v277
        %301 = vmatmul.f32.gmra.mxu0 %v283
        %v302 = vpop.f32.mrf.mxu0
        %v303 = vadd.f32 0.0, %v302
        %304 = vdwg.mxu0
        %v306 = vsel %vm281, %v270, 0
        %308 = vmatpush.msra.mxu0 0.0
        %309 = vmatpush.msra.mxu0 0.0
        %310 = vmatpush.msra.mxu0 0.0
        %311 = vmatpush.msra.mxu0 0.0
        %312 = vmatpush.msra.mxu0 0.0
        %313 = vmatpush.msra.mxu0 0.0
        %314 = vmatpush.msra.mxu0 0.0
        %315 = vmatpush.msra.mxu0 0.0
        %316 = vmatpush.msra.mxu0 0.0
        %317 = vmatpush.msra.mxu0 0.0
        %318 = vmatpush.msra.mxu0 0.0
        %319 = vmatpush.msra.mxu0 0.0
        %320 = vmatpush.msra.mxu0 %v274
        %321 = vmatpush.msra.mxu0 %v273
        %322 = vmatpush.msra.mxu0 %v272
        %323 = vmatpush.msra.mxu0 %v271
        %324 = vmatmul.f32.gmra.mxu0 %v306
        %v325 = vpop.f32.mrf.mxu0
        %v326 = vadd.f32 %v303, %v325
        %327 = vdwg.mxu0
        %v328 = vld [vmem:[%s3] sm:$0x1]
        %v330 = vperm.slane %v328, 0
        %v332 = vadd.f32 %v326, %v330
        %333 = vst [vmem:[%s269] sm:$0xff] %v332
        %s334 = sand.u32 %s126, 1
        %s335 = scalar_lea.sflag [#allocation4], %s334
        %s336 = sand.u32 %s126, 1
        %s337 = smul.addr %s336, 8
        %s338 = scalar_lea.vmem [#allocation8], %s337
        // Predicated region
        $region49: #{tpu_custom_call.1} parent=35 // pred_check
          %p339 = pneg %p136
        $region50: #{tpu_custom_call.1} parent=35 // pred_check_branch
          %341 = sbr.rel (%p339) target = $region52
        $region51: #{tpu_custom_call.1} parent=35 // pred_region
          %343 = vsyncadd %s335, 0
          %s344 = smul.addr %s24, 8
          %s345 = scalar_lea.hbm %s4, %s344
          %s347 = sshll.u32 %s338, 4
          %s348 = int_to_ptr.vmem [resolvable:$true] %s347
          %s349 = sshll.u32 %s345, 4
          %s350 = int_to_ptr.hbm [resolvable:$true] %s349
          %352 = dma.vmem_to_hbm [thread:$0]  %s348, 128, %s350, %s335
        $region52: #{tpu_custom_call.1} parent=35 // pred_fallthru
          _
      $region36: #{tpu_custom_call.1} parent=5 // pred_fallthru
        _
      %p353 = scmp.le.s32.totalorder 2, %s19
      // Predicated region
      $region53: #{tpu_custom_call.1} parent=5 // pred_check
        %p354 = pneg %p353
      $region54: #{tpu_custom_call.1} parent=5 // pred_check_branch
        %356 = sbr.rel (%p354) target = $region56
      $region55: #{tpu_custom_call.1} parent=5 // pred_region
        %s357 = ssub.s32 %s19, 2
        // Predicated region
        $region57: #{tpu_custom_call.1} parent=55 // pred_check
          %p358 = pneg %p142
        $region58: #{tpu_custom_call.1} parent=55 // pred_check_branch
          %360 = sbr.rel (%p358) target = $region60
        $region59: #{tpu_custom_call.1} parent=55 // pred_region
          %s361 = sand.u32 %s127, 1
          %s362 = scalar_lea.sflag [#allocation4], %s361
          %s363 = sand.u32 %s127, 1
          %s364 = smul.addr %s363, 8
          %s365 = scalar_lea.vmem [#allocation8], %s364
          %367 = dma.done %s362, 128
        $region60: #{tpu_custom_call.1} parent=55 // pred_fallthru
          _
      $region56: #{tpu_custom_call.1} parent=5 // pred_fallthru
        _
    $region6: #{tpu_custom_call.1} parent=1 // loop_footer
      %s23 = sadd.s32 1, %s19
    $region7: #{tpu_custom_call.1} parent=1 // loop_footer_branch
      %18 = sbr.rel target = $region3
    $region8: #{tpu_custom_call.1} parent=1 // loop_exit
      _
    %368 = vsyncpa [#allocation3], 1
    %s369 = scalar_lea.sflag [#allocation3], 1
    %370 = vsyncpa %s369, 1
    %371 = vsyncpa [#allocation6], 1
    %s372 = scalar_lea.sflag [#allocation6], 1
    %373 = vsyncpa %s372, 1
    %374 = vsyncpa [#allocation4], 1
    %s375 = scalar_lea.sflag [#allocation4], 1
    %376 = vsyncpa %s375, 1

</llo_original>
